<compile_context>
chip_gen: v5e
topology: v5e:2x2
jax: 0.10.0
libtpu: 0.0.40
codegen_flags: <defaults>
</compile_context>

<pallas_src>
import functools

import jax
import jax.numpy as jnp
from jax.experimental import pallas as pl
from jax.experimental.pallas import tpu as pltpu


_VMEM_LIMIT = 32 * 1024 * 1024      # safe on v5e/v6e (128 MiB) and v7x (64 MiB)
_SUBLANE_BY_ITEMSIZE = {4: 8, 2: 16, 1: 32}


def _sublane(dtype):
    """Sublane packing multiple for the dtype (8 f32, 16 bf16, 32 int8/fp8)."""
    return _SUBLANE_BY_ITEMSIZE.get(jnp.dtype(dtype).itemsize, 8)


def _cdiv(a, b):
    return -(-a // b)


def _lane_fold_factor(nv, c, max_lanes=1024):
    """Largest r with nv % r == 0, (r*c) % 128 == 0 and r*c <= max_lanes."""
    if c % 128 == 0:
        return 1
    for r in range(min(max_lanes // c, nv), 0, -1):
        if (r * c) % 128 == 0 and nv % r == 0:
            return r
    return 1


def _tile_rows(n_rows, row_bytes, sublane, target_bytes):
    """Row-tile sized by bytes: full array if small, else ~target_bytes."""
    if n_rows * row_bytes <= target_bytes or n_rows <= sublane:
        return int(n_rows)
    tm = max(sublane, (target_bytes // row_bytes) // sublane * sublane)
    return int(min(tm, (n_rows // sublane) * sublane))


# ----------------------------------------------------------------------------
# Kernel 1: per-channel partial statistics (mean, centered M2) per core.
# Grid: (ncores "parallel", tiles-per-core "arbitrary").
# ----------------------------------------------------------------------------
def _bn_stats_kernel(x_ref, mean_ref, m2_ref, *, n_rows, tm, tpc, need_mask):
    t = pl.program_id(1)

    @pl.when(t == 0)
    def _init():
        mean_ref[...] = jnp.zeros_like(mean_ref)
        m2_ref[...] = jnp.zeros_like(m2_ref)

    x = x_ref[...].astype(jnp.float32)                    # (tm, cf)

    if need_mask:
        core = pl.program_id(0)
        core_start = core * (tpc * tm)
        # Rows already consumed by this core before tile t (exact even when
        # the globally-partial / phantom tiles live in this core's range).
        n_a = jnp.clip(n_rows - core_start, 0, t * tm).astype(jnp.float32)
        n_valid = jnp.clip(n_rows - core_start - t * tm, 0, tm)
        row = jax.lax.broadcasted_iota(jnp.int32, (x.shape[0], 1), 0)
        mask = row < n_valid
        n_b = n_valid.astype(jnp.float32)
        xm = jnp.where(mask, x, 0.0)
        mean_b = jnp.sum(xm, axis=0, keepdims=True) / jnp.maximum(n_b, 1.0)
        d = jnp.where(mask, x - mean_b, 0.0)
    else:
        # Fast path: every tile is full, no iota / selects.
        n_a = (t * tm).astype(jnp.float32)
        n_b = jnp.float32(tm)
        mean_b = jnp.sum(x, axis=0, keepdims=True) * (1.0 / tm)
        d = x - mean_b
    m2_b = jnp.sum(d * d, axis=0, keepdims=True)          # (1, cf)

    # Chan / Welford parallel combine into the output-resident accumulators.
    n_ab = jnp.maximum(n_a + n_b, 1.0)
    w = n_b / n_ab
    delta = mean_b - mean_ref[...]
    mean_ref[...] = mean_ref[...] + delta * w
    m2_ref[...] = m2_ref[...] + m2_b + (delta * delta) * (n_a * w)


# ----------------------------------------------------------------------------
# Kernel 2: normalize = single FMA per element (affine already folded in).
# ----------------------------------------------------------------------------
def _bn_apply_kernel(x_ref, scale_ref, shift_ref, o_ref):
    x = x_ref[...].astype(jnp.float32)
    o_ref[...] = (x * scale_ref[...] + shift_ref[...]).astype(o_ref.dtype)


# ----------------------------------------------------------------------------
# Wrappers.
# ----------------------------------------------------------------------------
def _compute_stats(xf, *, ncores, target_bytes):
    """Per-core partial (mean, M2) over the folded array xf = (n_rows, cf)."""
    n_rows, cf = xf.shape
    sub = _sublane(xf.dtype)
    row_bytes = cf * jnp.dtype(xf.dtype).itemsize
    tm = _tile_rows(n_rows, row_bytes, sub, target_bytes)
    n_tiles = _cdiv(n_rows, tm)
    ncores_eff = max(1, min(ncores, n_tiles))
    tpc = _cdiv(n_tiles, ncores_eff)
    has_phantom = ncores_eff * tpc != n_tiles
    need_mask = (n_rows % tm != 0) or has_phantom

    if has_phantom:
        # Phantom tiles read (a clamped copy of) the last block; they are
        # masked out via n_valid == 0 inside the kernel.
        x_index = lambda core, t: (jnp.minimum(core * tpc + t, n_tiles - 1), 0)
    else:
        x_index = lambda core, t: (core * tpc + t, 0)

    # Per-core partials stored as 8 identical sublane rows so the output block
    # (8, cf) satisfies the (8, 128) tiling constraint.
    out_shape = [jax.ShapeDtypeStruct((ncores_eff * 8, cf), jnp.float32)] * 2
    mean_p, m2_p = pl.pallas_call(
        functools.partial(_bn_stats_kernel, n_rows=n_rows, tm=tm, tpc=tpc,
                          need_mask=need_mask),
        out_shape=out_shape,
        grid=(ncores_eff, tpc),
        in_specs=[pl.BlockSpec((tm, cf), x_index)],
        out_specs=[pl.BlockSpec((8, cf), lambda core, t: (core, 0))] * 2,
        compiler_params=pltpu.CompilerParams(
            dimension_semantics=("parallel", "arbitrary"),
            vmem_limit_bytes=_VMEM_LIMIT),
    )(xf)

    mean_p = mean_p.reshape(ncores_eff, 8, cf)[:, 0, :]
    m2_p = m2_p.reshape(ncores_eff, 8, cf)[:, 0, :]
    counts = jnp.asarray(
        [max(0, min(tpc * tm, n_rows - core * tpc * tm))
         for core in range(ncores_eff)], jnp.float32)
    return mean_p, m2_p, counts


def _combine_partials(means, m2s, counts):
    """Chan combine of K partial (mean, M2, count) along axis 0."""
    n = jnp.sum(counts)
    mean = jnp.sum(means * counts[:, None], axis=0) / n
    m2 = (jnp.sum(m2s, axis=0)
          + jnp.sum(counts[:, None] * jnp.square(means - mean), axis=0))
    return mean, m2, n


def _apply_affine(xf, scale_f, shift_f, *, target_bytes):
    n_rows, cf = xf.shape
    sub = _sublane(xf.dtype)
    row_bytes = cf * jnp.dtype(xf.dtype).itemsize
    tm = _tile_rows(n_rows, row_bytes, sub, target_bytes)
    grid = (_cdiv(n_rows, tm),)
    return pl.pallas_call(
        _bn_apply_kernel,
        out_shape=jax.ShapeDtypeStruct((n_rows, cf), xf.dtype),
        grid=grid,
        in_specs=[pl.BlockSpec((tm, cf), lambda i: (i, 0)),
                  pl.BlockSpec((1, cf), lambda i: (0, 0)),
                  pl.BlockSpec((1, cf), lambda i: (0, 0))],
        out_specs=pl.BlockSpec((tm, cf), lambda i: (i, 0)),
        compiler_params=pltpu.CompilerParams(
            dimension_semantics=("parallel",),
            vmem_limit_bytes=_VMEM_LIMIT),
    )(xf, scale_f, shift_f)


def batch_norm_lattice(lattice_values, gamma, beta,
                       running_mean=None, running_var=None, *,
                       training=True, momentum=0.1, eps=1e-5,
                       block_target_bytes=2 << 20, ncores=2):
    """Forward pass of BatchNormLatticeModule on (nr_vertices, val_dim)."""
    assert lattice_values.ndim == 2, \
        "lattice should be 2 dimensional, nr_vertices x val_full_dim"
    nv, c = lattice_values.shape
    gamma2 = gamma.reshape(1, c).astype(jnp.float32)
    beta2 = beta.reshape(1, c).astype(jnp.float32)

    # Lane fold (free row-major reshape): makes both passes lane-dense when
    # val_dim < 128.
    r = _lane_fold_factor(nv, c)
    xf = lattice_values.reshape(nv // r, r * c) if r > 1 else lattice_values
    n_rows = xf.shape[0]

    if training:
        mean_p, m2_p, counts = _compute_stats(
            xf, ncores=ncores, target_bytes=block_target_bytes)
        # 1) combine per-core partials over the folded channels,
        mean_f, m2_f, _ = _combine_partials(mean_p, m2_p, counts)     # (r*c,)
        # 2) combine the r lane-fold channel replicas (equal counts n_rows).
        if r > 1:
            rep_counts = jnp.full((r,), float(n_rows), jnp.float32)
            mean_c, m2_c, _ = _combine_partials(
                mean_f.reshape(r, c), m2_f.reshape(r, c), rep_counts)
        else:
            mean_c, m2_c = mean_f, m2_f
        mean = mean_c
        var = m2_c / nv                                               # biased
    else:
        assert running_mean is not None and running_var is not None, \
            "eval mode requires running_mean/running_var"
        mean = running_mean.reshape(c).astype(jnp.float32)
        var = running_var.reshape(c).astype(jnp.float32)

    # Fold affine into per-channel scale/shift (tiny (1,c) ops).
    inv = jax.lax.rsqrt(var + eps)
    scale = gamma2 * inv.reshape(1, c)
    shift = beta2 - mean.reshape(1, c) * scale
    scale_f = jnp.tile(scale, (1, r)) if r > 1 else scale
    shift_f = jnp.tile(shift, (1, r)) if r > 1 else shift

    y = _apply_affine(xf, scale_f, shift_f, target_bytes=block_target_bytes)
    y = y.reshape(nv, c) if r > 1 else y

    if training:
        var_unbiased = var * (nv / (nv - 1.0)) if nv > 1 else var
        if running_mean is None:
            new_rm, new_rv = mean, var_unbiased
        else:
            new_rm = ((1.0 - momentum) * running_mean.astype(jnp.float32)
                      + momentum * mean)
            new_rv = ((1.0 - momentum) * running_var.astype(jnp.float32)
                      + momentum * var_unbiased)
        return y, new_rm, new_rv
    return y, running_mean, running_var


# ----------------------------------------------------------------------------
# Self-test.
# ----------------------------------------------------------------------------
def _reference(x, gamma, beta, rm, rv, eps, momentum):
    mean = jnp.mean(x, axis=0)
    var = jnp.mean((x - mean) ** 2, axis=0)                 # biased
    y = (x - mean) * jax.lax.rsqrt(var + eps) * gamma + beta
    nv = x.shape[0]
    rm_new = (1 - momentum) * rm + momentum * mean
    rv_new = (1 - momentum) * rv + momentum * var * (nv / (nv - 1.0))
    return y, rm_new, rv_new


if __name__ == "__main__":
    key = jax.random.PRNGKey(0)
    eps, momentum = 1e-5, 0.1

    # (nv, c, block_target_bytes) -- exercises: single-tile lane-folded path,
    # multi-tile + 2-core split + phantom-tile masking, and the no-fold path.
    cases = [
        (1000, 64, 2 << 20),     # fold r=8, single full block
        (1000, 64, 96 * 1024),   # fold r=8, 3 tiles, 2 cores, phantom + mask
        (101, 64, 2 << 20),      # prime nv -> no lane fold (cf=64 full block)
    ]

    for idx, (nv, c, tgt) in enumerate(cases):
        key, k_x, k_g, k_b = jax.random.split(key, 4)
        x = jax.random.normal(k_x, (nv, c), jnp.float32) * 3.0 + 5.0
        gamma = 1.0 + 0.1 * jax.random.normal(k_g, (c,), jnp.float32)
        beta = 0.1 * jax.random.normal(k_b, (c,), jnp.float32)
        rm = jnp.zeros((c,), jnp.float32)
        rv = jnp.ones((c,), jnp.float32)

        y, new_rm, new_rv = batch_norm_lattice(
            x, gamma, beta, rm, rv, training=True,
            momentum=momentum, eps=eps, block_target_bytes=tgt)
        y = jax.block_until_ready(y)

        y_ref, rm_ref, rv_ref = _reference(x, gamma, beta, rm, rv, eps, momentum)
        assert y.shape == x.shape
        assert jnp.allclose(y, y_ref, rtol=1e-4, atol=1e-4), \
            f"case {idx}: y mismatch"
        assert jnp.allclose(new_rm, rm_ref, rtol=1e-4, atol=1e-4), \
            f"case {idx}: running_mean mismatch"
        assert jnp.allclose(new_rv, rv_ref, rtol=1e-4, atol=1e-4), \
            f"case {idx}: running_var mismatch"

        if idx == 0:
            # Eval-mode path (uses running stats; only the apply kernel runs).
            y_eval, _, _ = batch_norm_lattice(
                x, gamma, beta, rm_ref, rv_ref, training=False, eps=eps)
            y_eval = jax.block_until_ready(y_eval)
            y_eval_ref = ((x - rm_ref) * jax.lax.rsqrt(rv_ref + eps)
                          * gamma + beta)
            assert jnp.allclose(y_eval, y_eval_ref, rtol=1e-4, atol=1e-4), \
                "eval mismatch"

    print("KERNEL_OK")
</pallas_src>

<mosaic_0001>
module attributes {stable_mosaic.version = 11 : i64} {
  func.func @_bn_stats_kernel(%arg0: i32, %arg1: i32, %arg2: memref<100x640xf32, #tpu.memory_space<vmem>>, %arg3: memref<8x640xf32, #tpu.memory_space<vmem>>, %arg4: memref<8x640xf32, #tpu.memory_space<vmem>>) attributes {dimension_semantics = [#tpu.dimension_semantics<parallel>, #tpu.dimension_semantics<arbitrary>], iteration_bounds = array<i64: 1, 1>, scalar_prefetch = 0 : i64, scratch_operands = 0 : i64, tpu.core_type = #tpu.core_type<tc>, window_params = [{transform_indices = @transform_0, window_bounds = array<i64: 100, 640>}, {transform_indices = @transform_1, window_bounds = array<i64: 8, 640>}, {transform_indices = @transform_2, window_bounds = array<i64: 8, 640>}]} {
    %c0_i32 = arith.constant 0 : i32
    %0 = arith.cmpi eq, %arg1, %c0_i32 : i32
    %1 = arith.extui %0 : i1 to i32
    %c0_i32_0 = arith.constant 0 : i32
    %2 = arith.cmpi ne, %1, %c0_i32_0 : i32
    scf.if %2 {
      %cst_17 = arith.constant 0.000000e+00 : f32
      %35 = vector.broadcast %cst_17 : f32 to vector<8x640xf32>
      %c0_18 = arith.constant 0 : index
      %c0_19 = arith.constant 0 : index
      %36 = vector.load %arg3[%c0_18, %c0_19] : memref<8x640xf32, #tpu.memory_space<vmem>>, vector<8x640xf32>
      tpu.vector_store %arg3[%c0_18, %c0_19], %35 {strides = array<i32>} : memref<8x640xf32, #tpu.memory_space<vmem>>, vector<8x640xf32>,
      %cst_20 = arith.constant 0.000000e+00 : f32
      %37 = vector.broadcast %cst_20 : f32 to vector<8x640xf32>
      %c0_21 = arith.constant 0 : index
      %c0_22 = arith.constant 0 : index
      %38 = vector.load %arg4[%c0_21, %c0_22] : memref<8x640xf32, #tpu.memory_space<vmem>>, vector<8x640xf32>
      tpu.vector_store %arg4[%c0_21, %c0_22], %37 {strides = array<i32>} : memref<8x640xf32, #tpu.memory_space<vmem>>, vector<8x640xf32>,
    } else {
    }
    %c0 = arith.constant 0 : index
    %c0_1 = arith.constant 0 : index
    %3 = vector.load %arg2[%c0, %c0_1] : memref<100x640xf32, #tpu.memory_space<vmem>>, vector<100x640xf32>
    %c100_i32 = arith.constant 100 : i32
    %4 = arith.muli %arg1, %c100_i32 : i32
    %5 = arith.sitofp %4 : i32 to f32
    %cst = arith.constant dense<0.000000e+00> : vector<640xf32>
    %6 = vector.multi_reduction <add>, %3, %cst [0] : vector<100x640xf32> to vector<640xf32>
    %7 = vector.shape_cast %6 : vector<640xf32> to vector<1x640xf32>
    %cst_2 = arith.constant 0.00999999977 : f32
    %8 = vector.broadcast %cst_2 : f32 to vector<1x640xf32>
    %9 = arith.mulf %7, %8 : vector<1x640xf32>
    %10 = vector.broadcast %9 : vector<1x640xf32> to vector<100x640xf32>
    %11 = arith.subf %3, %10 : vector<100x640xf32>
    %12 = arith.mulf %11, %11 : vector<100x640xf32>
    %cst_3 = arith.constant dense<0.000000e+00> : vector<640xf32>
    %13 = vector.multi_reduction <add>, %12, %cst_3 [0] : vector<100x640xf32> to vector<640xf32>
    %14 = vector.shape_cast %13 : vector<640xf32> to vector<1x640xf32>
    %cst_4 = arith.constant 1.000000e+02 : f32
    %15 = arith.addf %5, %cst_4 : f32
    %cst_5 = arith.constant 1.000000e+00 : f32
    %16 = arith.maximumf %15, %cst_5 : f32
    %cst_6 = arith.constant 1.000000e+02 : f32
    %17 = arith.divf %cst_6, %16 : f32
    %c0_7 = arith.constant 0 : index
    %c0_8 = arith.constant 0 : index
    %18 = vector.load %arg3[%c0_7, %c0_8] : memref<8x640xf32, #tpu.memory_space<vmem>>, vector<8x640xf32>
    %19 = vector.broadcast %9 : vector<1x640xf32> to vector<8x640xf32>
    %20 = arith.subf %19, %18 : vector<8x640xf32>
    %c0_9 = arith.constant 0 : index
    %c0_10 = arith.constant 0 : index
    %21 = vector.load %arg3[%c0_9, %c0_10] : memref<8x640xf32, #tpu.memory_space<vmem>>, vector<8x640xf32>
    %22 = vector.broadcast %17 : f32 to vector<8x640xf32>
    %23 = arith.mulf %20, %22 : vector<8x640xf32>
    %24 = arith.addf %21, %23 : vector<8x640xf32>
    %c0_11 = arith.constant 0 : index
    %c0_12 = arith.constant 0 : index
    %25 = vector.load %arg3[%c0_11, %c0_12] : memref<8x640xf32, #tpu.memory_space<vmem>>, vector<8x640xf32>
    tpu.vector_store %arg3[%c0_11, %c0_12], %24 {strides = array<i32>} : memref<8x640xf32, #tpu.memory_space<vmem>>, vector<8x640xf32>,
    %c0_13 = arith.constant 0 : index
    %c0_14 = arith.constant 0 : index
    %26 = vector.load %arg4[%c0_13, %c0_14] : memref<8x640xf32, #tpu.memory_space<vmem>>, vector<8x640xf32>
    %27 = vector.broadcast %14 : vector<1x640xf32> to vector<8x640xf32>
    %28 = arith.addf %26, %27 : vector<8x640xf32>
    %29 = arith.mulf %20, %20 : vector<8x640xf32>
    %30 = arith.mulf %5, %17 : f32
    %31 = vector.broadcast %30 : f32 to vector<8x640xf32>
    %32 = arith.mulf %29, %31 : vector<8x640xf32>
    %33 = arith.addf %28, %32 : vector<8x640xf32>
    %c0_15 = arith.constant 0 : index
    %c0_16 = arith.constant 0 : index
    %34 = vector.load %arg4[%c0_15, %c0_16] : memref<8x640xf32, #tpu.memory_space<vmem>>, vector<8x640xf32>
    tpu.vector_store %arg4[%c0_15, %c0_16], %33 {strides = array<i32>} : memref<8x640xf32, #tpu.memory_space<vmem>>, vector<8x640xf32>,
    return
  }
  func.func @transform_0(%arg0: i32, %arg1: i32) -> (i32, i32) {
    %c1_i32 = arith.constant 1 : i32
    %0 = arith.muli %arg0, %c1_i32 : i32
    %1 = arith.addi %0, %arg1 : i32
    %c0_i32 = arith.constant 0 : i32
    %c0_i32_0 = arith.constant 0 : i32
    return %1, %c0_i32 : i32, i32
  }
  func.func @transform_1(%arg0: i32, %arg1: i32) -> (i32, i32) {
    %c0_i32 = arith.constant 0 : i32
    %c0_i32_0 = arith.constant 0 : i32
    return %arg0, %c0_i32 : i32, i32
  }
  func.func @transform_2(%arg0: i32, %arg1: i32) -> (i32, i32) {
    %c0_i32 = arith.constant 0 : i32
    %c0_i32_0 = arith.constant 0 : i32
    return %arg0, %c0_i32 : i32, i32
  }
}

</mosaic_0001>

<llo_original>
// kernel: tpu_custom_call.1
$region0: #{tpu_custom_call.1}
  #allocation0 [shape = 'u32[]', space=smem, size = 0x4, offset = 0x4, fixed_abs, tag = 'smem constant byte address 0x4 - core index']
  #allocation1 [shape = 'u32[72,128]{1,0:T(1,128)}', space=vmem, size = 0x9000, scoped, tag = 'internal scratch']
  %s0 = inlined_call_operand.hbm [shape: f32[100,640], index: 0, kind: input, shape index: {}]
  %s1 = inlined_call_operand.hbm [shape: f32[8,640], index: 1, kind: output, shape index: {0}]
  %s2 = inlined_call_operand.hbm [shape: f32[8,640], index: 2, kind: output, shape index: {1}]
  %3 = xla_tuple %s1, %s2
  %s4 = sld [smem:[#allocation0]]
  $region30: #{tpu_custom_call.1} parent=0
    _
  %s6 = ssub.s32 1, %s4
  %s7 = scalar_select 0, %s6, %s4
  $region1: #{tpu_custom_call.1} parent=0
    #allocation2 [shape = 'u8[266240]{0}', space=vmem, size = 0x41000, scoped, tag = 'input window, operand 0, single buffered']
    #allocation3 [shape = 's32[1]{0}', space=sflag, size = 0x4, scoped, tag = 'scoped memory for tpu_custom_call.1']
    #allocation4 [shape = 's32[1]{0}', space=sflag, size = 0x4, scoped, tag = 'scoped memory for tpu_custom_call.1']
    #allocation5 [shape = 'u8[20480]{0}', space=vmem, size = 0x5000, scoped, tag = 'output window, operand 0, single buffered']
    #allocation6 [shape = 'u8[20480]{0}', space=vmem, size = 0x5000, scoped, tag = 'output window, operand 1, single buffered']
    #allocation7 [shape = 's32[1]{0}', space=sflag, size = 0x4, scoped, tag = 'scoped memory for tpu_custom_call.1']
    %8 = vsyncpa [#allocation3], 0
    %9 = vsyncpa [#allocation4], 0
    %10 = vsyncpa [#allocation7], 0
    // Predicated region
    $region2: #{tpu_custom_call.1} parent=1 // pred_check
      _
    $region3: #{tpu_custom_call.1} parent=1 // pred_check_branch
      %12 = sbr.rel (0) target = $region5
    $region4: #{tpu_custom_call.1} parent=1 // pred_region
      %s13 = sadd.s32 0, 0
      %s14 = smul.u32 13, %s13
      %16 = vsyncadd [#allocation3], 0
      %s17 = smul.addr %s14, 5
      %s18 = smul.addr %s17, 8
      %s19 = scalar_lea.hbm %s0, %s18
      %s20 = sshll.u32 %s19, 4
      %s21 = int_to_ptr.hbm [resolvable:$true] %s20
      %s22 = sshll.u32 [#allocation2], 4
      %s23 = int_to_ptr.vmem [resolvable:$true] %s22
      %28 = dma.hbm_to_vmem [thread:$0]  %s21, 8320, %s23, [#allocation3], 640, 640, 40
    $region5: #{tpu_custom_call.1} parent=1 // pred_fallthru
      _
    // Predicated region
    $region6: #{tpu_custom_call.1} parent=1 // pred_check
      _
    $region7: #{tpu_custom_call.1} parent=1 // pred_check_branch
      %30 = sbr.rel (0) target = $region9
    $region8: #{tpu_custom_call.1} parent=1 // pred_region
      %32 = dma.done [#allocation3], 8320
    $region9: #{tpu_custom_call.1} parent=1 // pred_fallthru
      _
    %s33 = sadd.s32 0, 0
    %s34 = smul.u32 13, %s33
    %p35 = scmp.eq.s32.totalorder 0, 0
    // Predicated region
    $region10: #{tpu_custom_call.1} parent=1 // pred_check
      %p36 = pneg %p35
    $region11: #{tpu_custom_call.1} parent=1 // pred_check_branch
      %38 = sbr.rel (%p36) target = $region13
    $region12: #{tpu_custom_call.1} parent=1 // pred_region
      %39 = vst [vmem:[#allocation5] sm:$0xff] 0.0
      %40 = vst [vmem:[#allocation5 + $0x8] sm:$0xff] 0.0
      %41 = vst [vmem:[#allocation5 + $0x10] sm:$0xff] 0.0
      %42 = vst [vmem:[#allocation5 + $0x18] sm:$0xff] 0.0
      %43 = vst [vmem:[#allocation5 + $0x20] sm:$0xff] 0.0
      %44 = vst [vmem:[#allocation6] sm:$0xff] 0.0
      %45 = vst [vmem:[#allocation6 + $0x8] sm:$0xff] 0.0
      %46 = vst [vmem:[#allocation6 + $0x10] sm:$0xff] 0.0
      %47 = vst [vmem:[#allocation6 + $0x18] sm:$0xff] 0.0
      %48 = vst [vmem:[#allocation6 + $0x20] sm:$0xff] 0.0
    $region13: #{tpu_custom_call.1} parent=1 // pred_fallthru
      _
    %v49 = vld [vmem:[#allocation2] sm:$0xff]
    %v50 = vld [vmem:[#allocation2 + $0x8] sm:$0xff]
    %v51 = vld [vmem:[#allocation2 + $0x10] sm:$0xff]
    %v52 = vld [vmem:[#allocation2 + $0x18] sm:$0xff]
    %v53 = vld [vmem:[#allocation2 + $0x20] sm:$0xff]
    %v54 = vld [vmem:[#allocation2 + $0x28] sm:$0xff]
    %v55 = vld [vmem:[#allocation2 + $0x30] sm:$0xff]
    %v56 = vld [vmem:[#allocation2 + $0x38] sm:$0xff]
    %v57 = vld [vmem:[#allocation2 + $0x40] sm:$0xff]
    %v58 = vld [vmem:[#allocation2 + $0x48] sm:$0xff]
    %v59 = vld [vmem:[#allocation2 + $0x50] sm:$0xff]
    %v60 = vld [vmem:[#allocation2 + $0x58] sm:$0xff]
    %v61 = vld [vmem:[#allocation2 + $0x60] sm:$0xff]
    %v62 = vld [vmem:[#allocation2 + $0x68] sm:$0xff]
    %v63 = vld [vmem:[#allocation2 + $0x70] sm:$0xff]
    %v64 = vld [vmem:[#allocation2 + $0x78] sm:$0xff]
    %v65 = vld [vmem:[#allocation2 + $0x80] sm:$0xff]
    %v66 = vld [vmem:[#allocation2 + $0x88] sm:$0xff]
    %v67 = vld [vmem:[#allocation2 + $0x90] sm:$0xff]
    %v68 = vld [vmem:[#allocation2 + $0x98] sm:$0xff]
    %v69 = vld [vmem:[#allocation2 + $0xa0] sm:$0xff]
    %v70 = vld [vmem:[#allocation2 + $0xa8] sm:$0xff]
    %v71 = vld [vmem:[#allocation2 + $0xb0] sm:$0xff]
    %v72 = vld [vmem:[#allocation2 + $0xb8] sm:$0xff]
    %v73 = vld [vmem:[#allocation2 + $0xc0] sm:$0xff]
    %v74 = vld [vmem:[#allocation2 + $0xc8] sm:$0xff]
    %v75 = vld [vmem:[#allocation2 + $0xd0] sm:$0xff]
    %v76 = vld [vmem:[#allocation2 + $0xd8] sm:$0xff]
    %v77 = vld [vmem:[#allocation2 + $0xe0] sm:$0xff]
    %v78 = vld [vmem:[#allocation2 + $0xe8] sm:$0xff]
    %v79 = vld [vmem:[#allocation2 + $0xf0] sm:$0xff]
    %v80 = vld [vmem:[#allocation2 + $0xf8] sm:$0xff]
    %v81 = vld [vmem:[#allocation2 + $0x100] sm:$0xff]
    %v82 = vld [vmem:[#allocation2 + $0x108] sm:$0xff]
    %v83 = vld [vmem:[#allocation2 + $0x110] sm:$0xff]
    %v84 = vld [vmem:[#allocation2 + $0x118] sm:$0xff]
    %v85 = vld [vmem:[#allocation2 + $0x120] sm:$0xff]
    %v86 = vld [vmem:[#allocation2 + $0x128] sm:$0xff]
    %v87 = vld [vmem:[#allocation2 + $0x130] sm:$0xff]
    %v88 = vld [vmem:[#allocation2 + $0x138] sm:$0xff]
    %v89 = vld [vmem:[#allocation2 + $0x140] sm:$0xff]
    %v90 = vld [vmem:[#allocation2 + $0x148] sm:$0xff]
    %v91 = vld [vmem:[#allocation2 + $0x150] sm:$0xff]
    %v92 = vld [vmem:[#allocation2 + $0x158] sm:$0xff]
    %v93 = vld [vmem:[#allocation2 + $0x160] sm:$0xff]
    %v94 = vld [vmem:[#allocation2 + $0x168] sm:$0xff]
    %v95 = vld [vmem:[#allocation2 + $0x170] sm:$0xff]
    %v96 = vld [vmem:[#allocation2 + $0x178] sm:$0xff]
    %v97 = vld [vmem:[#allocation2 + $0x180] sm:$0xff]
    %v98 = vld [vmem:[#allocation2 + $0x188] sm:$0xff]
    %v99 = vld [vmem:[#allocation2 + $0x190] sm:$0xff]
    %v100 = vld [vmem:[#allocation2 + $0x198] sm:$0xff]
    %v101 = vld [vmem:[#allocation2 + $0x1a0] sm:$0xff]
    %v102 = vld [vmem:[#allocation2 + $0x1a8] sm:$0xff]
    %v103 = vld [vmem:[#allocation2 + $0x1b0] sm:$0xff]
    %v104 = vld [vmem:[#allocation2 + $0x1b8] sm:$0xff]
    %v105 = vld [vmem:[#allocation2 + $0x1c0] sm:$0xff]
    %v106 = vld [vmem:[#allocation2 + $0x1c8] sm:$0xff]
    %v107 = vld [vmem:[#allocation2 + $0x1d0] sm:$0xff]
    %v108 = vld [vmem:[#allocation2 + $0x1d8] sm:$0xff]
    %v109 = vld [vmem:[#allocation2 + $0x1e0] sm:$0xf]
    %v110 = vld [vmem:[#allocation2 + $0x1e8] sm:$0xf]
    %v111 = vld [vmem:[#allocation2 + $0x1f0] sm:$0xf]
    %v112 = vld [vmem:[#allocation2 + $0x1f8] sm:$0xf]
    %v113 = vld [vmem:[#allocation2 + $0x200] sm:$0xf]
    %s114 = smul.u32 0, 100
    %s115 = scvt.s32.f32 %s114
    %v116 = vadd.f32 %v49, %v54
    %v117 = vadd.f32 %v116, %v59
    %v118 = vadd.f32 %v117, %v64
    %v119 = vadd.f32 %v118, %v69
    %v120 = vadd.f32 %v119, %v74
    %v121 = vadd.f32 %v120, %v79
    %v122 = vadd.f32 %v121, %v84
    %v123 = vadd.f32 %v122, %v89
    %v124 = vadd.f32 %v123, %v94
    %v125 = vadd.f32 %v124, %v99
    %v126 = vadd.f32 %v125, %v104
    %vm127 = vcmask 1043456
    %v128 = vsel %vm127, %v109, 0.0
    %v129 = vadd.f32 %v126, %v128
    %v130 = vrot.slane %v129, 4
    %v131 = vadd.f32 %v129, %v130
    %v132 = vrot.slane %v131, 2
    %v133 = vadd.f32 %v131, %v132
    %v134 = vrot.slane %v133, 1
    %v135 = vadd.f32 %v133, %v134
    %v136 = vadd.f32 %v50, %v55
    %v137 = vadd.f32 %v136, %v60
    %v138 = vadd.f32 %v137, %v65
    %v139 = vadd.f32 %v138, %v70
    %v140 = vadd.f32 %v139, %v75
    %v141 = vadd.f32 %v140, %v80
    %v142 = vadd.f32 %v141, %v85
    %v143 = vadd.f32 %v142, %v90
    %v144 = vadd.f32 %v143, %v95
    %v145 = vadd.f32 %v144, %v100
    %v146 = vadd.f32 %v145, %v105
    %v147 = vsel %vm127, %v110, 0.0
    %v148 = vadd.f32 %v146, %v147
    %v149 = vrot.slane %v148, 4
    %v150 = vadd.f32 %v148, %v149
    %v151 = vrot.slane %v150, 2
    %v152 = vadd.f32 %v150, %v151
    %v153 = vrot.slane %v152, 1
    %v154 = vadd.f32 %v152, %v153
    %v155 = vadd.f32 %v51, %v56
    %v156 = vadd.f32 %v155, %v61
    %v157 = vadd.f32 %v156, %v66
    %v158 = vadd.f32 %v157, %v71
    %v159 = vadd.f32 %v158, %v76
    %v160 = vadd.f32 %v159, %v81
    %v161 = vadd.f32 %v160, %v86
    %v162 = vadd.f32 %v161, %v91
    %v163 = vadd.f32 %v162, %v96
    %v164 = vadd.f32 %v163, %v101
    %v165 = vadd.f32 %v164, %v106
    %v166 = vsel %vm127, %v111, 0.0
    %v167 = vadd.f32 %v165, %v166
    %v168 = vrot.slane %v167, 4
    %v169 = vadd.f32 %v167, %v168
    %v170 = vrot.slane %v169, 2
    %v171 = vadd.f32 %v169, %v170
    %v172 = vrot.slane %v171, 1
    %v173 = vadd.f32 %v171, %v172
    %v174 = vadd.f32 %v52, %v57
    %v175 = vadd.f32 %v174, %v62
    %v176 = vadd.f32 %v175, %v67
    %v177 = vadd.f32 %v176, %v72
    %v178 = vadd.f32 %v177, %v77
    %v179 = vadd.f32 %v178, %v82
    %v180 = vadd.f32 %v179, %v87
    %v181 = vadd.f32 %v180, %v92
    %v182 = vadd.f32 %v181, %v97
    %v183 = vadd.f32 %v182, %v102
    %v184 = vadd.f32 %v183, %v107
    %v185 = vsel %vm127, %v112, 0.0
    %v186 = vadd.f32 %v184, %v185
    %v187 = vrot.slane %v186, 4
    %v188 = vadd.f32 %v186, %v187
    %v189 = vrot.slane %v188, 2
    %v190 = vadd.f32 %v188, %v189
    %v191 = vrot.slane %v190, 1
    %v192 = vadd.f32 %v190, %v191
    %v193 = vadd.f32 %v53, %v58
    %v194 = vadd.f32 %v193, %v63
    %v195 = vadd.f32 %v194, %v68
    %v196 = vadd.f32 %v195, %v73
    %v197 = vadd.f32 %v196, %v78
    %v198 = vadd.f32 %v197, %v83
    %v199 = vadd.f32 %v198, %v88
    %v200 = vadd.f32 %v199, %v93
    %v201 = vadd.f32 %v200, %v98
    %v202 = vadd.f32 %v201, %v103
    %v203 = vadd.f32 %v202, %v108
    %v204 = vsel %vm127, %v113, 0.0
    %v205 = vadd.f32 %v203, %v204
    %v206 = vrot.slane %v205, 4
    %v207 = vadd.f32 %v205, %v206
    %v208 = vrot.slane %v207, 2
    %v209 = vadd.f32 %v207, %v208
    %v210 = vrot.slane %v209, 1
    %v211 = vadd.f32 %v209, %v210
    %v212 = vmul.f32 %v135, 0.01
    %v213 = vmul.f32 %v154, 0.01
    %v214 = vmul.f32 %v173, 0.01
    %v215 = vmul.f32 %v192, 0.01
    %v216 = vmul.f32 %v211, 0.01
    %v217 = vsub.f32 %v49, %v212
    %v218 = vsub.f32 %v50, %v213
    %v219 = vsub.f32 %v51, %v214
    %v220 = vsub.f32 %v52, %v215
    %v221 = vsub.f32 %v53, %v216
    %v222 = vsub.f32 %v54, %v212
    %v223 = vsub.f32 %v55, %v213
    %v224 = vsub.f32 %v56, %v214
    %v225 = vsub.f32 %v57, %v215
    %v226 = vsub.f32 %v58, %v216
    %v227 = vsub.f32 %v59, %v212
    %v228 = vsub.f32 %v60, %v213
    %v229 = vsub.f32 %v61, %v214
    %v230 = vsub.f32 %v62, %v215
    %v231 = vsub.f32 %v63, %v216
    %v232 = vsub.f32 %v64, %v212
    %v233 = vsub.f32 %v65, %v213
    %v234 = vsub.f32 %v66, %v214
    %v235 = vsub.f32 %v67, %v215
    %v236 = vsub.f32 %v68, %v216
    %v237 = vsub.f32 %v69, %v212
    %v238 = vsub.f32 %v70, %v213
    %v239 = vsub.f32 %v71, %v214
    %v240 = vsub.f32 %v72, %v215
    %v241 = vsub.f32 %v73, %v216
    %v242 = vsub.f32 %v74, %v212
    %v243 = vsub.f32 %v75, %v213
    %v244 = vsub.f32 %v76, %v214
    %v245 = vsub.f32 %v77, %v215
    %v246 = vsub.f32 %v78, %v216
    %v247 = vsub.f32 %v79, %v212
    %v248 = vsub.f32 %v80, %v213
    %v249 = vsub.f32 %v81, %v214
    %v250 = vsub.f32 %v82, %v215
    %v251 = vsub.f32 %v83, %v216
    %v252 = vsub.f32 %v84, %v212
    %v253 = vsub.f32 %v85, %v213
    %v254 = vsub.f32 %v86, %v214
    %v255 = vsub.f32 %v87, %v215
    %v256 = vsub.f32 %v88, %v216
    %v257 = vsub.f32 %v89, %v212
    %v258 = vsub.f32 %v90, %v213
    %v259 = vsub.f32 %v91, %v214
    %v260 = vsub.f32 %v92, %v215
    %v261 = vsub.f32 %v93, %v216
    %v262 = vsub.f32 %v94, %v212
    %v263 = vsub.f32 %v95, %v213
    %v264 = vsub.f32 %v96, %v214
    %v265 = vsub.f32 %v97, %v215
    %v266 = vsub.f32 %v98, %v216
    %v267 = vsub.f32 %v99, %v212
    %v268 = vsub.f32 %v100, %v213
    %v269 = vsub.f32 %v101, %v214
    %v270 = vsub.f32 %v102, %v215
    %v271 = vsub.f32 %v103, %v216
    %v272 = vsub.f32 %v104, %v212
    %v273 = vsub.f32 %v105, %v213
    %v274 = vsub.f32 %v106, %v214
    %v275 = vsub.f32 %v107, %v215
    %v276 = vsub.f32 %v108, %v216
    %v277 = vsub.f32 %v109, %v212
    %v278 = vsub.f32 %v110, %v213
    %v279 = vsub.f32 %v111, %v214
    %v280 = vsub.f32 %v112, %v215
    %v281 = vsub.f32 %v113, %v216
    %v282 = vmul.f32 %v217, %v217
    %v283 = vmul.f32 %v218, %v218
    %v284 = vmul.f32 %v219, %v219
    %v285 = vmul.f32 %v220, %v220
    %v286 = vmul.f32 %v221, %v221
    %v287 = vmul.f32 %v222, %v222
    %v288 = vmul.f32 %v223, %v223
    %v289 = vmul.f32 %v224, %v224
    %v290 = vmul.f32 %v225, %v225
    %v291 = vmul.f32 %v226, %v226
    %v292 = vmul.f32 %v227, %v227
    %v293 = vmul.f32 %v228, %v228
    %v294 = vmul.f32 %v229, %v229
    %v295 = vmul.f32 %v230, %v230
    %v296 = vmul.f32 %v231, %v231
    %v297 = vmul.f32 %v232, %v232
    %v298 = vmul.f32 %v233, %v233
    %v299 = vmul.f32 %v234, %v234
    %v300 = vmul.f32 %v235, %v235
    %v301 = vmul.f32 %v236, %v236
    %v302 = vmul.f32 %v237, %v237
    %v303 = vmul.f32 %v238, %v238
    %v304 = vmul.f32 %v239, %v239
    %v305 = vmul.f32 %v240, %v240
    %v306 = vmul.f32 %v241, %v241
    %v307 = vmul.f32 %v242, %v242
    %v308 = vmul.f32 %v243, %v243
    %v309 = vmul.f32 %v244, %v244
    %v310 = vmul.f32 %v245, %v245
    %v311 = vmul.f32 %v246, %v246
    %v312 = vmul.f32 %v247, %v247
    %v313 = vmul.f32 %v248, %v248
    %v314 = vmul.f32 %v249, %v249
    %v315 = vmul.f32 %v250, %v250
    %v316 = vmul.f32 %v251, %v251
    %v317 = vmul.f32 %v252, %v252
    %v318 = vmul.f32 %v253, %v253
    %v319 = vmul.f32 %v254, %v254
    %v320 = vmul.f32 %v255, %v255
    %v321 = vmul.f32 %v256, %v256
    %v322 = vmul.f32 %v257, %v257
    %v323 = vmul.f32 %v258, %v258
    %v324 = vmul.f32 %v259, %v259
    %v325 = vmul.f32 %v260, %v260
    %v326 = vmul.f32 %v261, %v261
    %v327 = vmul.f32 %v262, %v262
    %v328 = vmul.f32 %v263, %v263
    %v329 = vmul.f32 %v264, %v264
    %v330 = vmul.f32 %v265, %v265
    %v331 = vmul.f32 %v266, %v266
    %v332 = vmul.f32 %v267, %v267
    %v333 = vmul.f32 %v268, %v268
    %v334 = vmul.f32 %v269, %v269
    %v335 = vmul.f32 %v270, %v270
    %v336 = vmul.f32 %v271, %v271
    %v337 = vmul.f32 %v272, %v272
    %v338 = vmul.f32 %v273, %v273
    %v339 = vmul.f32 %v274, %v274
    %v340 = vmul.f32 %v275, %v275
    %v341 = vmul.f32 %v276, %v276
    %v342 = vmul.f32 %v277, %v277
    %v343 = vmul.f32 %v278, %v278
    %v344 = vmul.f32 %v279, %v279
    %v345 = vmul.f32 %v280, %v280
    %v346 = vmul.f32 %v281, %v281
    %v347 = vadd.f32 %v282, %v287
    %v348 = vadd.f32 %v347, %v292
    %v349 = vadd.f32 %v348, %v297
    %v350 = vadd.f32 %v349, %v302
    %v351 = vadd.f32 %v350, %v307
    %v352 = vadd.f32 %v351, %v312
    %v353 = vadd.f32 %v352, %v317
    %v354 = vadd.f32 %v353, %v322
    %v355 = vadd.f32 %v354, %v327
    %v356 = vadd.f32 %v355, %v332
    %v357 = vadd.f32 %v356, %v337
    %v358 = vsel %vm127, %v342, 0.0
    %v359 = vadd.f32 %v357, %v358
    %v360 = vrot.slane %v359, 4
    %v361 = vadd.f32 %v359, %v360
    %v362 = vrot.slane %v361, 2
    %v363 = vadd.f32 %v361, %v362
    %v364 = vrot.slane %v363, 1
    %v365 = vadd.f32 %v363, %v364
    %v366 = vadd.f32 %v283, %v288
    %v367 = vadd.f32 %v366, %v293
    %v368 = vadd.f32 %v367, %v298
    %v369 = vadd.f32 %v368, %v303
    %v370 = vadd.f32 %v369, %v308
    %v371 = vadd.f32 %v370, %v313
    %v372 = vadd.f32 %v371, %v318
    %v373 = vadd.f32 %v372, %v323
    %v374 = vadd.f32 %v373, %v328
    %v375 = vadd.f32 %v374, %v333
    %v376 = vadd.f32 %v375, %v338
    %v377 = vsel %vm127, %v343, 0.0
    %v378 = vadd.f32 %v376, %v377
    %v379 = vrot.slane %v378, 4
    %v380 = vadd.f32 %v378, %v379
    %v381 = vrot.slane %v380, 2
    %v382 = vadd.f32 %v380, %v381
    %v383 = vrot.slane %v382, 1
    %v384 = vadd.f32 %v382, %v383
    %v385 = vadd.f32 %v284, %v289
    %v386 = vadd.f32 %v385, %v294
    %v387 = vadd.f32 %v386, %v299
    %v388 = vadd.f32 %v387, %v304
    %v389 = vadd.f32 %v388, %v309
    %v390 = vadd.f32 %v389, %v314
    %v391 = vadd.f32 %v390, %v319
    %v392 = vadd.f32 %v391, %v324
    %v393 = vadd.f32 %v392, %v329
    %v394 = vadd.f32 %v393, %v334
    %v395 = vadd.f32 %v394, %v339
    %v396 = vsel %vm127, %v344, 0.0
    %v397 = vadd.f32 %v395, %v396
    %v398 = vrot.slane %v397, 4
    %v399 = vadd.f32 %v397, %v398
    %v400 = vrot.slane %v399, 2
    %v401 = vadd.f32 %v399, %v400
    %v402 = vrot.slane %v401, 1
    %v403 = vadd.f32 %v401, %v402
    %v404 = vadd.f32 %v285, %v290
    %v405 = vadd.f32 %v404, %v295
    %v406 = vadd.f32 %v405, %v300
    %v407 = vadd.f32 %v406, %v305
    %v408 = vadd.f32 %v407, %v310
    %v409 = vadd.f32 %v408, %v315
    %v410 = vadd.f32 %v409, %v320
    %v411 = vadd.f32 %v410, %v325
    %v412 = vadd.f32 %v411, %v330
    %v413 = vadd.f32 %v412, %v335
    %v414 = vadd.f32 %v413, %v340
    %v415 = vsel %vm127, %v345, 0.0
    %v416 = vadd.f32 %v414, %v415
    %v417 = vrot.slane %v416, 4
    %v418 = vadd.f32 %v416, %v417
    %v419 = vrot.slane %v418, 2
    %v420 = vadd.f32 %v418, %v419
    %v421 = vrot.slane %v420, 1
    %v422 = vadd.f32 %v420, %v421
    %v423 = vadd.f32 %v286, %v291
    %v424 = vadd.f32 %v423, %v296
    %v425 = vadd.f32 %v424, %v301
    %v426 = vadd.f32 %v425, %v306
    %v427 = vadd.f32 %v426, %v311
    %v428 = vadd.f32 %v427, %v316
    %v429 = vadd.f32 %v428, %v321
    %v430 = vadd.f32 %v429, %v326
    %v431 = vadd.f32 %v430, %v331
    %v432 = vadd.f32 %v431, %v336
    %v433 = vadd.f32 %v432, %v341
    %v434 = vsel %vm127, %v346, 0.0
    %v435 = vadd.f32 %v433, %v434
    %v436 = vrot.slane %v435, 4
    %v437 = vadd.f32 %v435, %v436
    %v438 = vrot.slane %v437, 2
    %v439 = vadd.f32 %v437, %v438
    %v440 = vrot.slane %v439, 1
    %v441 = vadd.f32 %v439, %v440
    %s442 = sadd.f32 %s115, 100.0
    %s443 = smax.f32 %s442, 1.0
    %v444 = vstv %s443
    %v445 = vrcp.pop %v444
    %v446 = vmul.f32 %v444, %v445
    %v447 = vsub.f32 1.0, %v446
    %v448 = vmul.f32 %v445, %v447
    %v449 = vadd.f32 %v445, %v448
    %vm450 = vweird.f32 %v444
    %vm451 = vweird.f32 %v445
    %vm452 = vmor %vm450, %vm451
    %v453 = vsel %vm452, %v445, %v449
    %v454 = vand.u32 2147483647, %v444
    %vm455 = vcmp.eq.f32.partialorder %v454, 8.507059e+37
    %v456 = vand.u32 %v444, 2147483648
    %v457 = vor.u32 1.1754944e-38, %v456
    %v458 = vsel %vm455, %v457, %v453
    %s459 = vtos %v458
    %s460 = smul.f32 100.0, %s459
    %v461 = vld [vmem:[#allocation5] sm:$0xff]
    %v462 = vld [vmem:[#allocation5 + $0x8] sm:$0xff]
    %v463 = vld [vmem:[#allocation5 + $0x10] sm:$0xff]
    %v464 = vld [vmem:[#allocation5 + $0x18] sm:$0xff]
    %v465 = vld [vmem:[#allocation5 + $0x20] sm:$0xff]
    %v466 = vsub.f32 %v212, %v461
    %v467 = vsub.f32 %v213, %v462
    %v468 = vsub.f32 %v214, %v463
    %v469 = vsub.f32 %v215, %v464
    %v470 = vsub.f32 %v216, %v465
    %v471 = vstv %s460
    %v472 = vmul.f32 %v466, %v471
    %v473 = vmul.f32 %v467, %v471
    %v474 = vmul.f32 %v468, %v471
    %v475 = vmul.f32 %v469, %v471
    %v476 = vmul.f32 %v470, %v471
    %v477 = vadd.f32 %v461, %v472
    %v478 = vadd.f32 %v462, %v473
    %v479 = vadd.f32 %v463, %v474
    %v480 = vadd.f32 %v464, %v475
    %v481 = vadd.f32 %v465, %v476
    %482 = vst [vmem:[#allocation5] sm:$0xff] %v477
    %483 = vst [vmem:[#allocation5 + $0x8] sm:$0xff] %v478
    %484 = vst [vmem:[#allocation5 + $0x10] sm:$0xff] %v479
    %485 = vst [vmem:[#allocation5 + $0x18] sm:$0xff] %v480
    %486 = vst [vmem:[#allocation5 + $0x20] sm:$0xff] %v481
    %v487 = vld [vmem:[#allocation6] sm:$0xff]
    %v488 = vld [vmem:[#allocation6 + $0x8] sm:$0xff]
    %v489 = vld [vmem:[#allocation6 + $0x10] sm:$0xff]
    %v490 = vld [vmem:[#allocation6 + $0x18] sm:$0xff]
    %v491 = vld [vmem:[#allocation6 + $0x20] sm:$0xff]
    %v492 = vadd.f32 %v487, %v365
    %v493 = vadd.f32 %v488, %v384
    %v494 = vadd.f32 %v489, %v403
    %v495 = vadd.f32 %v490, %v422
    %v496 = vadd.f32 %v491, %v441
    %v497 = vmul.f32 %v466, %v466
    %v498 = vmul.f32 %v467, %v467
    %v499 = vmul.f32 %v468, %v468
    %v500 = vmul.f32 %v469, %v469
    %v501 = vmul.f32 %v470, %v470
    %s502 = smul.f32 %s115, %s460
    %v503 = vstv %s502
    %v504 = vmul.f32 %v497, %v503
    %v505 = vmul.f32 %v498, %v503
    %v506 = vmul.f32 %v499, %v503
    %v507 = vmul.f32 %v500, %v503
    %v508 = vmul.f32 %v501, %v503
    %v509 = vadd.f32 %v492, %v504
    %v510 = vadd.f32 %v493, %v505
    %v511 = vadd.f32 %v494, %v506
    %v512 = vadd.f32 %v495, %v507
    %v513 = vadd.f32 %v496, %v508
    %514 = vst [vmem:[#allocation6] sm:$0xff] %v509
    %515 = vst [vmem:[#allocation6 + $0x8] sm:$0xff] %v510
    %516 = vst [vmem:[#allocation6 + $0x10] sm:$0xff] %v511
    %517 = vst [vmem:[#allocation6 + $0x18] sm:$0xff] %v512
    %518 = vst [vmem:[#allocation6 + $0x20] sm:$0xff] %v513
    // Predicated region
    $region14: #{tpu_custom_call.1} parent=1 // pred_check
      _
    $region15: #{tpu_custom_call.1} parent=1 // pred_check_branch
      %520 = sbr.rel (0) target = $region17
    $region16: #{tpu_custom_call.1} parent=1 // pred_region
      %522 = vsyncadd [#allocation4], 0
      %s524 = sshll.u32 [#allocation5], 4
      %s525 = int_to_ptr.vmem [resolvable:$true] %s524
      %s526 = sshll.u32 %s1, 4
      %s527 = int_to_ptr.hbm [resolvable:$true] %s526
      %529 = dma.vmem_to_hbm [thread:$0]  %s525, 640, %s527, [#allocation4]
    $region17: #{tpu_custom_call.1} parent=1 // pred_fallthru
      _
    // Predicated region
    $region18: #{tpu_custom_call.1} parent=1 // pred_check
      _
    $region19: #{tpu_custom_call.1} parent=1 // pred_check_branch
      %531 = sbr.rel (0) target = $region21
    $region20: #{tpu_custom_call.1} parent=1 // pred_region
      %533 = vsyncadd [#allocation7], 0
      %s535 = sshll.u32 [#allocation6], 4
      %s536 = int_to_ptr.vmem [resolvable:$true] %s535
      %s537 = sshll.u32 %s2, 4
      %s538 = int_to_ptr.hbm [resolvable:$true] %s537
      %540 = dma.vmem_to_hbm [thread:$0]  %s536, 640, %s538, [#allocation7]
    $region21: #{tpu_custom_call.1} parent=1 // pred_fallthru
      _
    // Predicated region
    $region22: #{tpu_custom_call.1} parent=1 // pred_check
      _
    $region23: #{tpu_custom_call.1} parent=1 // pred_check_branch
      %542 = sbr.rel (0) target = $region25
    $region24: #{tpu_custom_call.1} parent=1 // pred_region
      %544 = dma.done [#allocation4], 640
    $region25: #{tpu_custom_call.1} parent=1 // pred_fallthru
      _
    // Predicated region
    $region26: #{tpu_custom_call.1} parent=1 // pred_check
      _
    $region27: #{tpu_custom_call.1} parent=1 // pred_check_branch
      %546 = sbr.rel (0) target = $region29
    $region28: #{tpu_custom_call.1} parent=1 // pred_region
      %548 = dma.done [#allocation7], 640
    $region29: #{tpu_custom_call.1} parent=1 // pred_fallthru
      _
    %549 = vsyncpa [#allocation3], 1
    %550 = vsyncpa [#allocation4], 1
    %551 = vsyncpa [#allocation7], 1

</llo_original>
